<compile_context>
chip_gen: v5e
topology: v5e:2x2
jax: 0.10.0
libtpu: 0.0.40
codegen_flags: <defaults>
</compile_context>

<pallas_src>
import functools

import jax
import jax.numpy as jnp
from jax.experimental import pallas as pl
from jax.experimental.pallas import tpu as pltpu

LANE = 128
SUBLANE = 8


def _round_up(x, m):
    return (x + m - 1) // m * m


def mlp_kernel(x_ref, w1_ref, b1_ref, w2_ref, b2_ref, w3_ref, b3_ref, o_ref):
    # In-kernel f32 -> bf16 cast of the streamed x tile (VPU, free; avoids a
    # separate XLA convert pass over x in HBM).
    x = x_ref[...].astype(jnp.bfloat16)

    # Layer 1: Linear(obs -> hidden) + ReLU.  bf16 MXU operands, f32 accumulate.
    h1 = jnp.dot(x, w1_ref[...], preferred_element_type=jnp.float32)
    h1 = jnp.maximum(h1 + b1_ref[...], 0.0)

    # Layer 2: Linear(hidden -> hidden) + ReLU.
    h2 = jnp.dot(h1.astype(jnp.bfloat16), w2_ref[...],
                 preferred_element_type=jnp.float32)
    h2 = jnp.maximum(h2 + b2_ref[...], 0.0)

    # Layer 3: Linear(hidden -> n_actions), no activation.
    out = jnp.dot(h2.astype(jnp.bfloat16), w3_ref[...],
                  preferred_element_type=jnp.float32)
    o_ref[...] = (out + b3_ref[...]).astype(o_ref.dtype)


def prepare_params(params):
    """One-time pre-pack (call OUTSIDE the per-step forward): weights -> bf16
    MXU operands, biases -> f32.  Removes all per-call conversion ops."""
    w1, b1, w2, b2, w3, b3 = params
    return (w1.astype(jnp.bfloat16), b1.astype(jnp.float32),
            w2.astype(jnp.bfloat16), b2.astype(jnp.float32),
            w3.astype(jnp.bfloat16), b3.astype(jnp.float32))


@functools.partial(jax.jit, static_argnames=("tile_b",))
def net_forward(x, packed_params, *, tile_b=4096):
    """Fused MLP forward. x: (B, obs_size) float32 -> (B, n_actions) float32."""
    w1, b1, w2, b2, w3, b3 = packed_params
    B, obs_size = x.shape
    hidden = w1.shape[1]
    n_actions = w3.shape[1]

    # Batch tile: as large as requested to amortize per-grid-step overhead,
    # but no larger than ceil(B/2) (rounded to a sublane multiple) so at least
    # two grid steps exist and both TensorCores are used on megacore parts.
    # The ragged last block (B not a multiple of tb) is handled by Pallas.
    tb_cap = max(SUBLANE, _round_up(tile_b, SUBLANE))
    half_b = _round_up(pl.cdiv(B, 2), SUBLANE)
    tb = max(SUBLANE, min(tb_cap, half_b))
    n_blocks = pl.cdiv(B, tb)

    # Weights / biases: constant block index -> fetched once, resident in VMEM
    # across all grid steps.  At hidden=32 the default double-buffering of
    # these tiny blocks costs ~12 KiB; if hidden scales to >=1024, switch them
    # to single-buffering (pl.Buffered(1)) / whole-array VMEM placement.
    resident = lambda a: pl.BlockSpec(a.shape, lambda i: (0,) * a.ndim)

    # VMEM budget against the lane-padded layout: x / out tiles occupy
    # tb x 128 lanes x 4 B each (double-buffered); h1/h2 temporaries similar.
    per_tile_bytes = tb * LANE * 4
    vmem_limit = int(min(48 * 1024 * 1024,
                         max(32 * 1024 * 1024, 10 * per_tile_bytes)))

    flops = 2 * B * (obs_size * hidden + hidden * hidden + hidden * n_actions)
    bytes_accessed = (x.size * 4                                   # f32 x read
                      + (w1.size + w2.size + w3.size) * 2          # bf16 weights
                      + (b1.size + b2.size + b3.size) * 4          # f32 biases
                      + B * n_actions * 4)                         # f32 output

    return pl.pallas_call(
        mlp_kernel,
        out_shape=jax.ShapeDtypeStruct((B, n_actions), jnp.float32),
        grid_spec=pltpu.PrefetchScalarGridSpec(
            num_scalar_prefetch=0,
            grid=(n_blocks,),
            in_specs=[
                pl.BlockSpec((tb, obs_size), lambda i: (i, 0)),    # x tile (f32)
                resident(w1), resident(b1),
                resident(w2), resident(b2),
                resident(w3), resident(b3),
            ],
            out_specs=pl.BlockSpec((tb, n_actions), lambda i: (i, 0)),
        ),
        compiler_params=pltpu.CompilerParams(
            dimension_semantics=("parallel",),   # batch tiles shard across TCs
            vmem_limit_bytes=vmem_limit,
        ),
        cost_estimate=pl.CostEstimate(
            flops=flops, transcendentals=0, bytes_accessed=bytes_accessed),
    )(x, w1, b1, w2, b2, w3, b3)


def init_params(key, obs_size, hidden_size, n_actions):
    """Deterministic init matching nn.Linear fan-in uniform init; weights are
    stored transposed as (in, out) for the x @ W convention."""
    ks = jax.random.split(key, 6)

    def uniform(k, shape, fan_in):
        bound = 1.0 / jnp.sqrt(fan_in)
        return jax.random.uniform(k, shape, jnp.float32, -bound, bound)

    w1 = uniform(ks[0], (obs_size, hidden_size), obs_size)
    b1 = uniform(ks[1], (1, hidden_size), obs_size)
    w2 = uniform(ks[2], (hidden_size, hidden_size), hidden_size)
    b2 = uniform(ks[3], (1, hidden_size), hidden_size)
    w3 = uniform(ks[4], (hidden_size, n_actions), hidden_size)
    b3 = uniform(ks[5], (1, n_actions), hidden_size)
    return (w1, b1, w2, b2, w3, b3)


def ref_forward_bf16(x, params):
    """Pure-JAX reference matching the kernel's bf16-operand / f32-accumulate
    numerics."""
    w1, b1, w2, b2, w3, b3 = params
    bf = jnp.bfloat16
    h = jnp.dot(x.astype(bf), w1.astype(bf),
                preferred_element_type=jnp.float32) + b1
    h = jnp.maximum(h, 0.0)
    h = jnp.dot(h.astype(bf), w2.astype(bf),
                preferred_element_type=jnp.float32) + b2
    h = jnp.maximum(h, 0.0)
    return jnp.dot(h.astype(bf), w3.astype(bf),
                   preferred_element_type=jnp.float32) + b3


def ref_forward_f32(x, params):
    w1, b1, w2, b2, w3, b3 = params
    h = jnp.maximum(x @ w1 + b1, 0.0)
    h = jnp.maximum(h @ w2 + b2, 0.0)
    return h @ w3 + b3


if __name__ == "__main__":
    obs_size, hidden_size, n_actions = 16, 32, 8
    batch = 8

    key = jax.random.PRNGKey(0)
    k_x, k_x2, k_p = jax.random.split(key, 3)
    params = init_params(k_p, obs_size, hidden_size, n_actions)
    packed = prepare_params(params)      # one-time pre-pack, outside the jit

    # Small batch (single grid step).
    x = jax.random.normal(k_x, (batch, obs_size), jnp.float32)
    out = net_forward(x, packed)
    jax.block_until_ready(out)
    assert out.shape == (batch, n_actions)
    assert jnp.allclose(out, ref_forward_bf16(x, params), atol=1e-3, rtol=1e-3)
    assert jnp.allclose(out, ref_forward_f32(x, params), atol=5e-2, rtol=5e-2)

    # Larger, non-multiple batch: 3 grid steps with a ragged (masked) tail.
    x2 = jax.random.normal(k_x2, (260, obs_size), jnp.float32)
    out2 = net_forward(x2, packed, tile_b=128)
    jax.block_until_ready(out2)
    assert out2.shape == (260, n_actions)
    assert jnp.allclose(out2, ref_forward_bf16(x2, params), atol=1e-3, rtol=1e-3)

    # Same batch with the default (large) tile: 2 grid steps (>=2 TC split).
    out3 = net_forward(x2, packed)
    jax.block_until_ready(out3)
    assert out3.shape == (260, n_actions)
    assert jnp.allclose(out3, ref_forward_bf16(x2, params), atol=1e-3, rtol=1e-3)

    print("KERNEL_OK")
</pallas_src>

<mosaic_0001>
module attributes {stable_mosaic.version = 11 : i64} {
  func.func @mlp_kernel(%arg0: i32, %arg1: memref<8x16xf32, #tpu.memory_space<vmem>>, %arg2: memref<16x32xbf16, #tpu.memory_space<vmem>>, %arg3: memref<1x32xf32, #tpu.memory_space<vmem>>, %arg4: memref<32x32xbf16, #tpu.memory_space<vmem>>, %arg5: memref<1x32xf32, #tpu.memory_space<vmem>>, %arg6: memref<32x8xbf16, #tpu.memory_space<vmem>>, %arg7: memref<1x8xf32, #tpu.memory_space<vmem>>, %arg8: memref<8x8xf32, #tpu.memory_space<vmem>>) attributes {dimension_semantics = [#tpu.dimension_semantics<parallel>], iteration_bounds = array<i64: 1>, scalar_prefetch = 0 : i64, scratch_operands = 0 : i64, tpu.core_type = #tpu.core_type<tc>, window_params = [{transform_indices = @transform_0, window_bounds = array<i64: 8, 16>}, {pipeline_mode = #tpu.pipeline_mode<synchronous>, transform_indices = @transform_1, window_bounds = array<i64: 16, 32>}, {pipeline_mode = #tpu.pipeline_mode<synchronous>, transform_indices = @transform_2, window_bounds = array<i64: 1, 32>}, {pipeline_mode = #tpu.pipeline_mode<synchronous>, transform_indices = @transform_3, window_bounds = array<i64: 32, 32>}, {pipeline_mode = #tpu.pipeline_mode<synchronous>, transform_indices = @transform_4, window_bounds = array<i64: 1, 32>}, {pipeline_mode = #tpu.pipeline_mode<synchronous>, transform_indices = @transform_5, window_bounds = array<i64: 32, 8>}, {pipeline_mode = #tpu.pipeline_mode<synchronous>, transform_indices = @transform_6, window_bounds = array<i64: 1, 8>}, {transform_indices = @transform_7, window_bounds = array<i64: 8, 8>}]} {
    %c0 = arith.constant 0 : index
    %c0_0 = arith.constant 0 : index
    %0 = vector.load %arg1[%c0, %c0_0] : memref<8x16xf32, #tpu.memory_space<vmem>>, vector<8x16xf32>
    %1 = arith.truncf %0 : vector<8x16xf32> to vector<8x16xbf16>
    %c0_1 = arith.constant 0 : index
    %c0_2 = arith.constant 0 : index
    %2 = vector.load %arg2[%c0_1, %c0_2] : memref<16x32xbf16, #tpu.memory_space<vmem>>, vector<16x32xbf16>
    %cst = arith.constant dense<0.000000e+00> : vector<8x32xf32>
    %3 = tpu.matmul %1, %2, %cst {dimension_numbers = #tpu.dot_dimension_numbers<[1], [0], [0], [1], [0, 0, 1, 1], [], []>} : vector<8x16xbf16>, vector<16x32xbf16>, vector<8x32xf32> -> vector<8x32xf32>
    %c0_3 = arith.constant 0 : index
    %c0_4 = arith.constant 0 : index
    %4 = vector.load %arg3[%c0_3, %c0_4] : memref<1x32xf32, #tpu.memory_space<vmem>>, vector<1x32xf32>
    %5 = vector.broadcast %4 : vector<1x32xf32> to vector<8x32xf32>
    %6 = arith.addf %3, %5 : vector<8x32xf32>
    %cst_5 = arith.constant 0.000000e+00 : f32
    %7 = vector.broadcast %cst_5 : f32 to vector<8x32xf32>
    %8 = arith.maximumf %6, %7 : vector<8x32xf32>
    %9 = arith.truncf %8 : vector<8x32xf32> to vector<8x32xbf16>
    %c0_6 = arith.constant 0 : index
    %c0_7 = arith.constant 0 : index
    %10 = vector.load %arg4[%c0_6, %c0_7] : memref<32x32xbf16, #tpu.memory_space<vmem>>, vector<32x32xbf16>
    %cst_8 = arith.constant dense<0.000000e+00> : vector<8x32xf32>
    %11 = tpu.matmul %9, %10, %cst_8 {dimension_numbers = #tpu.dot_dimension_numbers<[1], [0], [0], [1], [0, 0, 1, 1], [], []>} : vector<8x32xbf16>, vector<32x32xbf16>, vector<8x32xf32> -> vector<8x32xf32>
    %c0_9 = arith.constant 0 : index
    %c0_10 = arith.constant 0 : index
    %12 = vector.load %arg5[%c0_9, %c0_10] : memref<1x32xf32, #tpu.memory_space<vmem>>, vector<1x32xf32>
    %13 = vector.broadcast %12 : vector<1x32xf32> to vector<8x32xf32>
    %14 = arith.addf %11, %13 : vector<8x32xf32>
    %cst_11 = arith.constant 0.000000e+00 : f32
    %15 = vector.broadcast %cst_11 : f32 to vector<8x32xf32>
    %16 = arith.maximumf %14, %15 : vector<8x32xf32>
    %17 = arith.truncf %16 : vector<8x32xf32> to vector<8x32xbf16>
    %c0_12 = arith.constant 0 : index
    %c0_13 = arith.constant 0 : index
    %18 = vector.load %arg6[%c0_12, %c0_13] : memref<32x8xbf16, #tpu.memory_space<vmem>>, vector<32x8xbf16>
    %cst_14 = arith.constant dense<0.000000e+00> : vector<8x8xf32>
    %19 = tpu.matmul %17, %18, %cst_14 {dimension_numbers = #tpu.dot_dimension_numbers<[1], [0], [0], [1], [0, 0, 1, 1], [], []>} : vector<8x32xbf16>, vector<32x8xbf16>, vector<8x8xf32> -> vector<8x8xf32>
    %c0_15 = arith.constant 0 : index
    %c0_16 = arith.constant 0 : index
    %20 = vector.load %arg7[%c0_15, %c0_16] : memref<1x8xf32, #tpu.memory_space<vmem>>, vector<1x8xf32>
    %21 = vector.broadcast %20 : vector<1x8xf32> to vector<8x8xf32>
    %22 = arith.addf %19, %21 : vector<8x8xf32>
    %c0_17 = arith.constant 0 : index
    %c0_18 = arith.constant 0 : index
    %23 = vector.load %arg8[%c0_17, %c0_18] : memref<8x8xf32, #tpu.memory_space<vmem>>, vector<8x8xf32>
    tpu.vector_store %arg8[%c0_17, %c0_18], %22 {strides = array<i32>} : memref<8x8xf32, #tpu.memory_space<vmem>>, vector<8x8xf32>,
    return
  }
  func.func @transform_0(%arg0: i32) -> (i32, i32) {
    %c0_i32 = arith.constant 0 : i32
    %c0_i32_0 = arith.constant 0 : i32
    return %arg0, %c0_i32 : i32, i32
  }
  func.func @transform_1(%arg0: i32) -> (i32, i32) {
    %c0_i32 = arith.constant 0 : i32
    %c0_i32_0 = arith.constant 0 : i32
    %c0_i32_1 = arith.constant 0 : i32
    return %c0_i32, %c0_i32_0 : i32, i32
  }
  func.func @transform_2(%arg0: i32) -> (i32, i32) {
    %c0_i32 = arith.constant 0 : i32
    %c0_i32_0 = arith.constant 0 : i32
    %c0_i32_1 = arith.constant 0 : i32
    return %c0_i32, %c0_i32_0 : i32, i32
  }
  func.func @transform_3(%arg0: i32) -> (i32, i32) {
    %c0_i32 = arith.constant 0 : i32
    %c0_i32_0 = arith.constant 0 : i32
    %c0_i32_1 = arith.constant 0 : i32
    return %c0_i32, %c0_i32_0 : i32, i32
  }
  func.func @transform_4(%arg0: i32) -> (i32, i32) {
    %c0_i32 = arith.constant 0 : i32
    %c0_i32_0 = arith.constant 0 : i32
    %c0_i32_1 = arith.constant 0 : i32
    return %c0_i32, %c0_i32_0 : i32, i32
  }
  func.func @transform_5(%arg0: i32) -> (i32, i32) {
    %c0_i32 = arith.constant 0 : i32
    %c0_i32_0 = arith.constant 0 : i32
    %c0_i32_1 = arith.constant 0 : i32
    return %c0_i32, %c0_i32_0 : i32, i32
  }
  func.func @transform_6(%arg0: i32) -> (i32, i32) {
    %c0_i32 = arith.constant 0 : i32
    %c0_i32_0 = arith.constant 0 : i32
    %c0_i32_1 = arith.constant 0 : i32
    return %c0_i32, %c0_i32_0 : i32, i32
  }
  func.func @transform_7(%arg0: i32) -> (i32, i32) {
    %c0_i32 = arith.constant 0 : i32
    %c0_i32_0 = arith.constant 0 : i32
    return %arg0, %c0_i32 : i32, i32
  }
}

</mosaic_0001>

<llo_original>
// kernel: net_forward.1
$region0: #{net_forward.1}
  #allocation0 [shape = 'u32[]', space=smem, size = 0x4, offset = 0x4, fixed_abs, tag = 'smem constant byte address 0x4 - core index']
  #allocation1 [shape = 'u32[72,128]{1,0:T(1,128)}', space=vmem, size = 0x9000, scoped, tag = 'internal scratch']
  %s0 = inlined_call_operand.hbm [shape: f32[8,16], index: 0, kind: input, shape index: {}]
  %s1 = inlined_call_operand.hbm [shape: bf16[16,32], index: 1, kind: input, shape index: {}]
  %s2 = inlined_call_operand.vmem [shape: f32[1,32], index: 2, kind: input, shape index: {}]
  %s3 = inlined_call_operand.vmem [shape: bf16[32,32], index: 3, kind: input, shape index: {}]
  %s4 = inlined_call_operand.vmem [shape: f32[1,32], index: 4, kind: input, shape index: {}]
  %s5 = inlined_call_operand.vmem [shape: bf16[32,8], index: 5, kind: input, shape index: {}]
  %s6 = inlined_call_operand.vmem [shape: f32[1,8], index: 6, kind: input, shape index: {}]
  %s7 = inlined_call_operand.hbm [shape: f32[8,8], index: 7, kind: output, shape index: {}]
  %s8 = sld [smem:[#allocation0]]
  $region46: #{net_forward.1} parent=0
    _
  %s10 = ssub.s32 1, %s8
  %s11 = scalar_select 0, %s10, %s8
  $region1: #{net_forward.1} parent=0
    #allocation2 [shape = 'u8[4096]{0}', space=vmem, size = 0x1000, scoped, tag = 'input window, operand 0, single buffered']
    #allocation3 [shape = 's32[1]{0}', space=sflag, size = 0x4, scoped, tag = 'scoped memory for net_forward.1']
    #allocation4 [shape = 's32[1]{0}', space=sflag, size = 0x4, scoped, tag = 'scoped memory for net_forward.1']
    #allocation5 [shape = 'u8[4096]{0}', space=vmem, size = 0x1000, scoped, tag = 'input window, operand 1, single buffered']
    #allocation6 [shape = 's32[1]{0}', space=sflag, size = 0x4, scoped, tag = 'scoped memory for net_forward.1']
    #allocation7 [shape = 'u8[4096]{0}', space=vmem, size = 0x1000, scoped, tag = 'output window, operand 0, single buffered']
    %12 = vsyncpa [#allocation3], 0
    %13 = vsyncpa [#allocation6], 0
    %14 = vsyncpa [#allocation4], 0
    // Predicated region
    $region2: #{net_forward.1} parent=1 // pred_check
      _
    $region3: #{net_forward.1} parent=1 // pred_check_branch
      %16 = sbr.rel (0) target = $region5
    $region4: #{net_forward.1} parent=1 // pred_region
      %18 = vsyncadd [#allocation3], 0
      %s20 = sshll.u32 %s0, 4
      %s21 = int_to_ptr.hbm [resolvable:$true] %s20
      %s22 = sshll.u32 [#allocation2], 4
      %s23 = int_to_ptr.vmem [resolvable:$true] %s22
      %25 = dma.hbm_to_vmem [thread:$0]  %s21, 128, %s23, [#allocation3]
    $region5: #{net_forward.1} parent=1 // pred_fallthru
      _
    // Predicated region
    $region6: #{net_forward.1} parent=1 // pred_check
      _
    $region7: #{net_forward.1} parent=1 // pred_check_branch
      %27 = sbr.rel (0) target = $region9
    $region8: #{net_forward.1} parent=1 // pred_region
      %29 = vsyncadd [#allocation6], 0
      %s30 = sshll.u32 %s1, 4
      %s31 = int_to_ptr.hbm [resolvable:$true] %s30
      %s32 = sshll.u32 [#allocation5], 4
      %s33 = int_to_ptr.vmem [resolvable:$true] %s32
      %38 = dma.hbm_to_vmem [thread:$0]  %s31, 128, %s33, [#allocation6], 64, 64, 4
    $region9: #{net_forward.1} parent=1 // pred_fallthru
      _
    // Predicated region
    $region10: #{net_forward.1} parent=1 // pred_check
      _
    $region11: #{net_forward.1} parent=1 // pred_check_branch
      %40 = sbr.rel (0) target = $region13
    $region12: #{net_forward.1} parent=1 // pred_region
      _
    $region13: #{net_forward.1} parent=1 // pred_fallthru
      _
    // Predicated region
    $region14: #{net_forward.1} parent=1 // pred_check
      _
    $region15: #{net_forward.1} parent=1 // pred_check_branch
      %42 = sbr.rel (0) target = $region17
    $region16: #{net_forward.1} parent=1 // pred_region
      _
    $region17: #{net_forward.1} parent=1 // pred_fallthru
      _
    // Predicated region
    $region18: #{net_forward.1} parent=1 // pred_check
      _
    $region19: #{net_forward.1} parent=1 // pred_check_branch
      %44 = sbr.rel (0) target = $region21
    $region20: #{net_forward.1} parent=1 // pred_region
      _
    $region21: #{net_forward.1} parent=1 // pred_fallthru
      _
    // Predicated region
    $region22: #{net_forward.1} parent=1 // pred_check
      _
    $region23: #{net_forward.1} parent=1 // pred_check_branch
      %46 = sbr.rel (0) target = $region25
    $region24: #{net_forward.1} parent=1 // pred_region
      _
    $region25: #{net_forward.1} parent=1 // pred_fallthru
      _
    // Predicated region
    $region26: #{net_forward.1} parent=1 // pred_check
      _
    $region27: #{net_forward.1} parent=1 // pred_check_branch
      %48 = sbr.rel (0) target = $region29
    $region28: #{net_forward.1} parent=1 // pred_region
      _
    $region29: #{net_forward.1} parent=1 // pred_fallthru
      _
    // Predicated region
    $region30: #{net_forward.1} parent=1 // pred_check
      _
    $region31: #{net_forward.1} parent=1 // pred_check_branch
      %50 = sbr.rel (0) target = $region33
    $region32: #{net_forward.1} parent=1 // pred_region
      %52 = dma.done [#allocation3], 128
    $region33: #{net_forward.1} parent=1 // pred_fallthru
      _
    // Predicated region
    $region34: #{net_forward.1} parent=1 // pred_check
      _
    $region35: #{net_forward.1} parent=1 // pred_check_branch
      %54 = sbr.rel (0) target = $region37
    $region36: #{net_forward.1} parent=1 // pred_region
      %56 = dma.done [#allocation6], 128
    $region37: #{net_forward.1} parent=1 // pred_fallthru
      _
    %v58 = vld [vmem:[#allocation2] sm:$0xff]
    %v59 = vpack.c.bf16 %v58, %v58
    %v60 = vld [vmem:[#allocation5] sm:$0xf]
    %v61 = vld [vmem:[#allocation5 + $0x4] sm:$0xf]
    %v62 = vld [vmem:[%s2] sm:$0x1]
    %v64 = vperm.slane %v62, 0
    %v68 = vunpack.c.l.b16 %v60
    %v69 = vunpack.c.l.b16 %v61
    %v70 = vpack.c.b16 %v69, %v68
    %vm72 = vcmask 130048
    %v74 = vsel %vm72, %v59, 0
    %76 = vmatpush.bf16.msra.mxu0 0
    %77 = vmatpush.bf16.msra.mxu0 0
    %78 = vmatpush.bf16.msra.mxu0 0
    %79 = vmatpush.bf16.msra.mxu0 0
    %80 = vmatpush.bf16.msra.mxu0 0
    %81 = vmatpush.bf16.msra.mxu0 0
    %82 = vmatpush.bf16.msra.mxu0 0
    %83 = vmatpush.bf16.msra.mxu0 %v70
    %84 = vmatmul.bf16.gmra.mxu0 %v74
    %v85 = vpop.f32.mrf.mxu0
    %v86 = vadd.f32 %v64, %v85
    %v87 = vpop.f32.mrf.mxu0
    %88 = vdwg.mxu0
    %v89 = vmax.f32 %v86, 0.0
    %v90 = vpack.c.bf16 %v89, %v89
    %v91 = vld [vmem:[%s3] sm:$0xf]
    %v92 = vld [vmem:[%s3 + $0x4] sm:$0xf]
    %v93 = vld [vmem:[%s3 + $0x8] sm:$0xf]
    %v94 = vld [vmem:[%s3 + $0xc] sm:$0xf]
    %v95 = vld [vmem:[%s4] sm:$0x1]
    %v97 = vperm.slane %v95, 0
    %v103 = vunpack.c.l.b16 %v91
    %v104 = vunpack.c.l.b16 %v92
    %v105 = vunpack.c.l.b16 %v93
    %v106 = vunpack.c.l.b16 %v94
    %v107 = vpack.c.b16 %v104, %v103
    %v108 = vpack.c.b16 %v106, %v105
    %vm111 = vcmask 261120
    %v113 = vsel %vm111, %v90, 0
    %115 = vmatpush.bf16.msra.mxu0 0
    %116 = vmatpush.bf16.msra.mxu0 0
    %117 = vmatpush.bf16.msra.mxu0 0
    %118 = vmatpush.bf16.msra.mxu0 0
    %119 = vmatpush.bf16.msra.mxu0 0
    %120 = vmatpush.bf16.msra.mxu0 0
    %121 = vmatpush.bf16.msra.mxu0 %v108
    %122 = vmatpush.bf16.msra.mxu0 %v107
    %123 = vmatmul.bf16.gmra.mxu0 %v113
    %v124 = vpop.f32.mrf.mxu0
    %v125 = vadd.f32 %v97, %v124
    %v126 = vpop.f32.mrf.mxu0
    %127 = vdwg.mxu0
    %v128 = vmax.f32 %v125, 0.0
    %v129 = vpack.c.bf16 %v128, %v128
    %v130 = vld [vmem:[%s5] sm:$0xf]
    %v131 = vld [vmem:[%s5 + $0x4] sm:$0xf]
    %v132 = vld [vmem:[%s5 + $0x8] sm:$0xf]
    %v133 = vld [vmem:[%s5 + $0xc] sm:$0xf]
    %v134 = vld [vmem:[%s6] sm:$0x1]
    %v136 = vperm.slane %v134, 0
    %v142 = vunpack.c.l.b16 %v130
    %v143 = vunpack.c.l.b16 %v131
    %v144 = vunpack.c.l.b16 %v132
    %v145 = vunpack.c.l.b16 %v133
    %v146 = vpack.c.b16 %v143, %v142
    %v147 = vpack.c.b16 %v145, %v144
    %v151 = vsel %vm111, %v129, 0
    %153 = vmatpush.bf16.msra.mxu0 0
    %154 = vmatpush.bf16.msra.mxu0 0
    %155 = vmatpush.bf16.msra.mxu0 0
    %156 = vmatpush.bf16.msra.mxu0 0
    %157 = vmatpush.bf16.msra.mxu0 0
    %158 = vmatpush.bf16.msra.mxu0 0
    %159 = vmatpush.bf16.msra.mxu0 %v147
    %160 = vmatpush.bf16.msra.mxu0 %v146
    %161 = vmatmul.bf16.gmra.mxu0 %v151
    %v162 = vpop.f32.mrf.mxu0
    %v163 = vadd.f32 %v136, %v162
    %v164 = vpop.f32.mrf.mxu0
    %165 = vdwg.mxu0
    %vm166 = vcmask 64512
    %167 = vst.msk [vmem:[#allocation7] sm:$0xff] %vm166, %v163
    // Predicated region
    $region38: #{net_forward.1} parent=1 // pred_check
      _
    $region39: #{net_forward.1} parent=1 // pred_check_branch
      %169 = sbr.rel (0) target = $region41
    $region40: #{net_forward.1} parent=1 // pred_region
      %171 = vsyncadd [#allocation4], 0
      %s173 = sshll.u32 [#allocation7], 4
      %s174 = int_to_ptr.vmem [resolvable:$true] %s173
      %s175 = sshll.u32 %s7, 4
      %s176 = int_to_ptr.hbm [resolvable:$true] %s175
      %178 = dma.vmem_to_hbm [thread:$0]  %s174, 128, %s176, [#allocation4]
    $region41: #{net_forward.1} parent=1 // pred_fallthru
      _
    // Predicated region
    $region42: #{net_forward.1} parent=1 // pred_check
      _
    $region43: #{net_forward.1} parent=1 // pred_check_branch
      %180 = sbr.rel (0) target = $region45
    $region44: #{net_forward.1} parent=1 // pred_region
      %182 = dma.done [#allocation4], 128
    $region45: #{net_forward.1} parent=1 // pred_fallthru
      _
    %183 = vsyncpa [#allocation3], 1
    %184 = vsyncpa [#allocation6], 1
    %185 = vsyncpa [#allocation4], 1

</llo_original>
